<compile_context>
chip_gen: v7x
topology: tpu7x:2x2x1
jax: 0.10.0
libtpu: 0.0.40
codegen_flags: <defaults>
</compile_context>

<pallas_src>
import functools

import jax
import jax.numpy as jnp
from jax import lax
from jax.experimental import pallas as pl
from jax.experimental.pallas import tpu as pltpu


def _decoder_kernel(x_ref, w_ref, b_ref, o_ref):
    """One L-tile of ConvTranspose1d(k=1,s=1) + bias + ReLU + permute.

    x_ref: (N*K, TL)   activations (free reshape of src), channels on sublanes
    w_ref: (N*K, N*O)  block-diagonal weight, VMEM-resident across the grid
    b_ref: (1, N*O)    bias tiled N times
    o_ref: (TL, N*O)   output tile: row = l, lanes = (n, o)
    """
    # TN matmul: contract the (N*K) channel axis (dim 0 of both operands).
    y = lax.dot_general(
        x_ref[...], w_ref[...],
        dimension_numbers=(((0,), (0,)), ((), ())),
        preferred_element_type=jnp.float32,
    )
    y = y + b_ref[...]
    o_ref[...] = jnp.maximum(y, 0.0).astype(o_ref.dtype)


def cnn_latent_decoder_forward(src, weight, bias, *, tile_l=512):
    """Pallas implementation of cnn_latent_decoder.forward.

    src:    (N, d_latent, L)        float32
    weight: (d_latent, d_model, 1)  ConvTranspose1d weight layout
    bias:   (d_model,)
    returns (L, N, d_model)
    """
    N, d_latent, L = src.shape
    d_model = weight.shape[1]

    # ---- cheap wrapper-side prep: no HBM pass over the activations ---------
    w2 = weight[:, :, 0]                                   # (K, O)
    # Block-diagonal weight folds the batch dim and the (2,0,1) permute into
    # the GEMM.  For very large N, tile the batch axis too instead.
    w_big = jnp.kron(jnp.eye(N, dtype=w2.dtype), w2)       # (N*K, N*O)
    b_big = jnp.tile(bias, N).reshape(1, N * d_model)      # (1, N*O)
    x2 = src.reshape(N * d_latent, L)                      # free reshape

    # L tile: multiple of 128 (lane width), or the full L when L is small.
    # Sweepable (256..2048); bigger tiles amortize the ~0.35 us/step overhead,
    # smaller tiles reduce vreg pressure for the (TL, N*O) result.
    assert tile_l % 128 == 0
    tl = L if L <= tile_l else tile_l
    grid = (pl.cdiv(L, tl),)

    out2 = pl.pallas_call(
        _decoder_kernel,
        out_shape=jax.ShapeDtypeStruct((L, N * d_model), src.dtype),
        grid=grid,
        in_specs=[
            pl.BlockSpec((N * d_latent, tl), lambda j: (0, j)),          # L-tiled
            pl.BlockSpec((N * d_latent, N * d_model), lambda j: (0, 0)),  # resident
            pl.BlockSpec((1, N * d_model), lambda j: (0, 0)),             # resident
        ],
        out_specs=pl.BlockSpec((tl, N * d_model), lambda j: (j, 0)),
        compiler_params=pltpu.CompilerParams(
            # Independent L tiles -> shard across both TensorCores on v7x.
            dimension_semantics=("parallel",),
        ),
    )(x2, w_big, b_big)

    # Free, contiguous split of the last dim -> (L, N, d_model).
    return out2.reshape(L, N, d_model)


def _reference(src, weight, bias):
    ref = jnp.einsum("nil,io->nol", src, weight[:, :, 0]) + bias[None, :, None]
    ref = jnp.maximum(ref, 0.0)
    return jnp.transpose(ref, (2, 0, 1))


if __name__ == "__main__":
    # Small shapes consistent with the module.  Two configs:
    #   * tiny L: single block covering the full array,
    #   * larger L with tile_l=128: multi-step grid incl. a partial final tile.
    configs = [
        # (N, d_latent, d_model, L, tile_l)
        (2, 16, 32, 8, 512),
        (2, 16, 32, 300, 128),
    ]

    key = jax.random.PRNGKey(0)
    for (N, d_latent, d_model, L, tile_l) in configs:
        key, k_x, k_w, k_b = jax.random.split(key, 4)
        src = jax.random.normal(k_x, (N, d_latent, L), dtype=jnp.float32)
        # ConvTranspose1d weight shape: (in_channels, out_channels, kernel_size)
        weight = jax.random.normal(
            k_w, (d_latent, d_model, 1), dtype=jnp.float32) * 0.1
        bias = jax.random.normal(k_b, (d_model,), dtype=jnp.float32) * 0.1

        fwd = jax.jit(functools.partial(cnn_latent_decoder_forward,
                                        tile_l=tile_l))
        out = jax.block_until_ready(fwd(src, weight, bias))

        ref = _reference(src, weight, bias)
        assert out.shape == (L, N, d_model), out.shape
        assert jnp.allclose(out, ref, atol=2e-3, rtol=2e-3), float(
            jnp.max(jnp.abs(out - ref)))

    print("KERNEL_OK")
</pallas_src>

<mosaic_0001>
module attributes {stable_mosaic.version = 11 : i64} {
  func.func @_decoder_kernel(%arg0: i32, %arg1: memref<32x8xf32, #tpu.memory_space<vmem>>, %arg2: memref<32x64xf32, #tpu.memory_space<vmem>>, %arg3: memref<1x64xf32, #tpu.memory_space<vmem>>, %arg4: memref<8x64xf32, #tpu.memory_space<vmem>>) attributes {dimension_semantics = [#tpu.dimension_semantics<parallel>], iteration_bounds = array<i64: 1>, scalar_prefetch = 0 : i64, scratch_operands = 0 : i64, tpu.core_type = #tpu.core_type<tc>, window_params = [{transform_indices = @transform_0, window_bounds = array<i64: 32, 8>}, {pipeline_mode = #tpu.pipeline_mode<synchronous>, transform_indices = @transform_1, window_bounds = array<i64: 32, 64>}, {pipeline_mode = #tpu.pipeline_mode<synchronous>, transform_indices = @transform_2, window_bounds = array<i64: 1, 64>}, {transform_indices = @transform_3, window_bounds = array<i64: 8, 64>}]} {
    %c0 = arith.constant 0 : index
    %c0_0 = arith.constant 0 : index
    %0 = vector.load %arg1[%c0, %c0_0] : memref<32x8xf32, #tpu.memory_space<vmem>>, vector<32x8xf32>
    %c0_1 = arith.constant 0 : index
    %c0_2 = arith.constant 0 : index
    %1 = vector.load %arg2[%c0_1, %c0_2] : memref<32x64xf32, #tpu.memory_space<vmem>>, vector<32x64xf32>
    %cst = arith.constant dense<0.000000e+00> : vector<8x64xf32>
    %2 = tpu.matmul %0, %1, %cst {dimension_numbers = #tpu.dot_dimension_numbers<[0], [0], [1], [1], [0, 1, 1, 1], [], []>} : vector<32x8xf32>, vector<32x64xf32>, vector<8x64xf32> -> vector<8x64xf32>
    %c0_3 = arith.constant 0 : index
    %c0_4 = arith.constant 0 : index
    %3 = vector.load %arg3[%c0_3, %c0_4] : memref<1x64xf32, #tpu.memory_space<vmem>>, vector<1x64xf32>
    %4 = vector.broadcast %3 : vector<1x64xf32> to vector<8x64xf32>
    %5 = arith.addf %2, %4 : vector<8x64xf32>
    %cst_5 = arith.constant 0.000000e+00 : f32
    %6 = vector.broadcast %cst_5 : f32 to vector<8x64xf32>
    %7 = arith.maximumf %5, %6 : vector<8x64xf32>
    %c0_6 = arith.constant 0 : index
    %c0_7 = arith.constant 0 : index
    %8 = vector.load %arg4[%c0_6, %c0_7] : memref<8x64xf32, #tpu.memory_space<vmem>>, vector<8x64xf32>
    tpu.vector_store %arg4[%c0_6, %c0_7], %7 {strides = array<i32>} : memref<8x64xf32, #tpu.memory_space<vmem>>, vector<8x64xf32>,
    return
  }
  func.func @transform_0(%arg0: i32) -> (i32, i32) {
    %c0_i32 = arith.constant 0 : i32
    %c0_i32_0 = arith.constant 0 : i32
    return %c0_i32, %arg0 : i32, i32
  }
  func.func @transform_1(%arg0: i32) -> (i32, i32) {
    %c0_i32 = arith.constant 0 : i32
    %c0_i32_0 = arith.constant 0 : i32
    %c0_i32_1 = arith.constant 0 : i32
    return %c0_i32, %c0_i32_0 : i32, i32
  }
  func.func @transform_2(%arg0: i32) -> (i32, i32) {
    %c0_i32 = arith.constant 0 : i32
    %c0_i32_0 = arith.constant 0 : i32
    %c0_i32_1 = arith.constant 0 : i32
    return %c0_i32, %c0_i32_0 : i32, i32
  }
  func.func @transform_3(%arg0: i32) -> (i32, i32) {
    %c0_i32 = arith.constant 0 : i32
    %c0_i32_0 = arith.constant 0 : i32
    return %arg0, %c0_i32 : i32, i32
  }
}

</mosaic_0001>

<llo_original>
// kernel: tile.8
$region0: #{tile.8}
  #allocation0 [shape = 's32[1]{0}', space=sflag, size = 0x4, scoped, tag = 'scoped memory for tile.8']
  %s0 = inlined_call_operand.vmem [shape: f32[32], index: 0, kind: input, shape index: {}]
  %s1 = inlined_call_operand.vmem [shape: f32[2,32], index: 1, kind: output, shape index: {}]
  // Predicated region
  $region2: #{tile.8} parent=0 // pred_check
    _
  $region3: #{tile.8} parent=0 // pred_check_branch
    %3 = sbr.rel (0) target = $region5
  $region4: #{tile.8} parent=0 // pred_region
    _
  $region5: #{tile.8} parent=0 // pred_fallthru
    _
  %v4 = vld [vmem:[%s0] ss:$0 sm:$0xff]
  %5 = vst [vmem:[%s1] sm:$0x3] %v4

// kernel: tile.9
$region0: #{tile.9}
  %s0 = inlined_call_operand.vmem [shape: f32[2,32], index: 0, kind: input, shape index: {}]
  %s1 = inlined_call_operand.vmem [shape: f32[1,64], index: 1, kind: output, shape index: {}]
  $region1: #{tile.9} parent=0
    #allocation0 [shape = 'u8[4096]{0}', space=vmem, size = 0x1000, scoped, tag = 'scoped mem for output reshape']
    #allocation1 [shape = 'u8[4096]{0}', space=vmem, size = 0x1000, scoped, tag = 'scoped mem for input reshape']
    %s3 = sshllo.u32 0, 2
    %v4 = vld [vmem:[%s0] sm:%s3]
    %5 = vst [vmem:[#allocation1] sm:%s3] %v4
    %v6 = vld [vmem:[#allocation1] sm:$0x1]
    %vm7 = vcmask 261120
    %8 = vst.msk [vmem:[#allocation0] sm:$0x1] %vm7, %v6
    %s9 = scalar_lea.vmem [#allocation1], 1
    %v10 = vld [vmem:[%s9] sm:$0x1]
    %11 = vrot.lane.b32.xlu0 %v10, 32
    %v12 = vpop.permute.xlu0 %11
    %vm13 = vcmask 523520
    %14 = vst.msk [vmem:[#allocation0] sm:$0x1] %vm13, %v12
    %s16 = sshllo.u32 0, 1
    %v18 = vld [vmem:[#allocation0] sm:%s16]
    %s19 = sshllo.u32 0, 1
    %20 = vst [vmem:[%s1] sm:%s19] %v18

// kernel: cnn_latent_decoder_forward.1
$region0: #{cnn_latent_decoder_forward.1}
  #allocation0 [shape = 'u32[]', space=smem, size = 0x4, offset = 0x4, fixed_abs, tag = 'smem constant byte address 0x4 - core index']
  #allocation1 [shape = 'u32[144,128]{1,0:T(1,128)}', space=vmem, size = 0x12000, scoped, tag = 'internal scratch']
  %s0 = inlined_call_operand.vmem [shape: f32[32,8], index: 0, kind: input, shape index: {}]
  %s1 = inlined_call_operand.vmem [shape: f32[32,64], index: 1, kind: input, shape index: {}]
  %s2 = inlined_call_operand.vmem [shape: f32[1,64], index: 2, kind: input, shape index: {}]
  %s3 = inlined_call_operand.vmem [shape: f32[8,64], index: 3, kind: output, shape index: {}]
  %s4 = sld [smem:[#allocation0]]
  $region22: #{cnn_latent_decoder_forward.1} parent=0
    _
  %s6 = ssub.s32 1, %s4
  %s7 = scalar_select 0, %s6, %s4
  // Predicated region
  $region2: #{cnn_latent_decoder_forward.1} parent=0 // pred_check
    _
  $region3: #{cnn_latent_decoder_forward.1} parent=0 // pred_check_branch
    %9 = sbr.rel (0) target = $region5
  $region4: #{cnn_latent_decoder_forward.1} parent=0 // pred_region
    _
  $region5: #{cnn_latent_decoder_forward.1} parent=0 // pred_fallthru
    _
  // Predicated region
  $region6: #{cnn_latent_decoder_forward.1} parent=0 // pred_check
    _
  $region7: #{cnn_latent_decoder_forward.1} parent=0 // pred_check_branch
    %11 = sbr.rel (0) target = $region9
  $region8: #{cnn_latent_decoder_forward.1} parent=0 // pred_region
    _
  $region9: #{cnn_latent_decoder_forward.1} parent=0 // pred_fallthru
    _
  // Predicated region
  $region10: #{cnn_latent_decoder_forward.1} parent=0 // pred_check
    _
  $region11: #{cnn_latent_decoder_forward.1} parent=0 // pred_check_branch
    %13 = sbr.rel (0) target = $region13
  $region12: #{cnn_latent_decoder_forward.1} parent=0 // pred_region
    _
  $region13: #{cnn_latent_decoder_forward.1} parent=0 // pred_fallthru
    _
  %v14 = vld [vmem:[%s0] sm:$0xff]
  %v15 = vld [vmem:[%s0 + $0x8] sm:$0xff]
  %v16 = vld [vmem:[%s0 + $0x10] sm:$0xff]
  %v17 = vld [vmem:[%s0 + $0x18] sm:$0xff]
  %v18 = vld [vmem:[%s1] sm:$0xff]
  %v19 = vld [vmem:[%s1 + $0x8] sm:$0xff]
  %v20 = vld [vmem:[%s1 + $0x10] sm:$0xff]
  %v21 = vld [vmem:[%s1 + $0x18] sm:$0xff]
  %v22 = vld [vmem:[%s2] sm:$0x1]
  %v24 = vlaneseq
  %v25 = vshrl.u32 %v24, 7
  %v26 = vsub.s32 0, %v25
  %v27 = vrot.slane %v22, %v26
  %29 = vxpose.xlu0.b32.start [1/16] %v14, 128
  %30 = vxpose.xlu0.b32.cont [2/16] %v15, 128
  %31 = vxpose.xlu0.b32.cont [3/16] %v16, 128
  %32 = vxpose.xlu0.b32.cont [4/16] %v17, 128
  %33 = vxpose.xlu0.b32.cont [5/16] 0.0, 128
  %34 = vxpose.xlu0.b32.cont [6/16] 0.0, 128
  %35 = vxpose.xlu0.b32.cont [7/16] 0.0, 128
  %36 = vxpose.xlu0.b32.cont [8/16] 0.0, 128
  %37 = vxpose.xlu0.b32.cont [9/16] 0.0, 128
  %38 = vxpose.xlu0.b32.cont [10/16] 0.0, 128
  %39 = vxpose.xlu0.b32.cont [11/16] 0.0, 128
  %40 = vxpose.xlu0.b32.cont [12/16] 0.0, 128
  %41 = vxpose.xlu0.b32.cont [13/16] 0.0, 128
  %42 = vxpose.xlu0.b32.cont [14/16] 0.0, 128
  %43 = vxpose.xlu0.b32.cont [15/16] 0.0, 128
  %44 = vxpose.xlu0.b32.end [16/16] 0.0, 128
  %v45 = vpop.trf.xlu0
  %v46 = vpop.trf.xlu0
  %v47 = vpop.trf.xlu0
  %v48 = vpop.trf.xlu0
  %v49 = vpop.trf.xlu0
  %v50 = vpop.trf.xlu0
  %v51 = vpop.trf.xlu0
  %v52 = vpop.trf.xlu0
  %v53 = vpop.trf.xlu0
  %v54 = vpop.trf.xlu0
  %v55 = vpop.trf.xlu0
  %v56 = vpop.trf.xlu0
  %v57 = vpop.trf.xlu0
  %v58 = vpop.trf.xlu0
  %v59 = vpop.trf.xlu0
  %v60 = vpop.trf.xlu0
  %vm61 = vcmask 261120
  %v63 = vsel %vm61, %v45, 0
  %65 = vmatprep.subr.mxu0 0.0
  %66 = vmatpush1.msra.mxu0 %v18
  %67 = vmatprep.subr.mxu0 0.0
  %68 = vmatpush1.msra.mxu0 %v19
  %69 = vmatprep.subr.mxu0 0.0
  %70 = vmatpush1.msra.mxu0 %v20
  %71 = vmatprep.subr.mxu0 0.0
  %72 = vmatpush1.msra.mxu0 %v21
  %73 = vmatprep.subr.mxu0 0.0
  %74 = vmatpush1.msra.mxu0 0.0
  %75 = vmatprep.subr.mxu0 0.0
  %76 = vmatpush1.msra.mxu0 0.0
  %77 = vmatprep.subr.mxu0 0.0
  %78 = vmatpush1.msra.mxu0 0.0
  %79 = vmatprep.subr.mxu0 0.0
  %80 = vmatpush1.msra.mxu0 0.0
  %81 = vmatprep.subr.mxu0 0.0
  %82 = vmatpush1.msra.mxu0 0.0
  %83 = vmatprep.subr.mxu0 0.0
  %84 = vmatpush1.msra.mxu0 0.0
  %85 = vmatprep.subr.mxu0 0.0
  %86 = vmatpush1.msra.mxu0 0.0
  %87 = vmatprep.subr.mxu0 0.0
  %88 = vmatpush1.msra.mxu0 0.0
  %89 = vmatprep.subr.mxu0 0.0
  %90 = vmatpush1.msra.mxu0 0.0
  %91 = vmatprep.subr.mxu0 0.0
  %92 = vmatpush1.msra.mxu0 0.0
  %93 = vmatprep.subr.mxu0 0.0
  %94 = vmatpush1.msra.mxu0 0.0
  %95 = vmatprep.subr.mxu0 0.0
  %96 = vmatpush1.msra.mxu0 0.0
  %97 = vmatprep.subr.mxu0 0.0
  %98 = vmatpush1.msra.mxu0 0.0
  %99 = vmatprep.subr.mxu0 0.0
  %100 = vmatpush1.msra.mxu0 0.0
  %101 = vmatprep.subr.mxu0 0.0
  %102 = vmatpush1.msra.mxu0 0.0
  %103 = vmatprep.subr.mxu0 0.0
  %104 = vmatpush1.msra.mxu0 0.0
  %105 = vmatprep.subr.mxu0 0.0
  %106 = vmatpush1.msra.mxu0 0.0
  %107 = vmatprep.subr.mxu0 0.0
  %108 = vmatpush1.msra.mxu0 0.0
  %109 = vmatprep.subr.mxu0 0.0
  %110 = vmatpush1.msra.mxu0 0.0
  %111 = vmatprep.subr.mxu0 0.0
  %112 = vmatpush1.msra.mxu0 0.0
  %113 = vmatprep.subr.mxu0 0.0
  %114 = vmatpush1.msra.mxu0 0.0
  %115 = vmatprep.subr.mxu0 0.0
  %116 = vmatpush1.msra.mxu0 0.0
  %117 = vmatprep.subr.mxu0 0.0
  %118 = vmatpush1.msra.mxu0 0.0
  %119 = vmatprep.subr.mxu0 0.0
  %120 = vmatpush1.msra.mxu0 0.0
  %121 = vmatprep.subr.mxu0 0.0
  %122 = vmatpush1.msra.mxu0 0.0
  %123 = vmatprep.subr.mxu0 0.0
  %124 = vmatpush1.msra.mxu0 0.0
  %125 = vmatprep.subr.mxu0 0.0
  %126 = vmatpush1.msra.mxu0 0.0
  %127 = vmatprep.subr.mxu0 0.0
  %128 = vmatpush1.msra.mxu0 0.0
  %129 = vmatprep.mubr.f32.mxu0 0.0
  %130 = vmatmul.mubr.f32.gmra.mrb[0].mxu0 %v63
  %v131 = vpop.f32.mrb[0].mxu0
  %v132 = vadd.f32 %v27, %v131
  %v133 = vpop.f32.mrb[0].mxu0
  %134 = vdwg.mxu0
  %v135 = vmax.f32 %v132, 0.0
  %vm136 = vcmask 523264
  %137 = vst.msk [vmem:[%s3] sm:$0xff] %vm136, %v135
  // Predicated region
  $region14: #{cnn_latent_decoder_forward.1} parent=0 // pred_check
    _
  $region15: #{cnn_latent_decoder_forward.1} parent=0 // pred_check_branch
    %139 = sbr.rel (0) target = $region17
  $region16: #{cnn_latent_decoder_forward.1} parent=0 // pred_region
    _
  $region17: #{cnn_latent_decoder_forward.1} parent=0 // pred_fallthru
    _
  // Predicated region
  $region18: #{cnn_latent_decoder_forward.1} parent=0 // pred_check
    _
  $region19: #{cnn_latent_decoder_forward.1} parent=0 // pred_check_branch
    %141 = sbr.rel (0) target = $region21
  $region20: #{cnn_latent_decoder_forward.1} parent=0 // pred_region
    _
  $region21: #{cnn_latent_decoder_forward.1} parent=0 // pred_fallthru
    _

</llo_original>
